<compile_context>
chip_gen: v7x
topology: tpu7x:2x2x1
jax: 0.10.0
libtpu: 0.0.40
codegen_flags: <defaults>
</compile_context>

<pallas_src>
import functools
import math

import jax
import jax.numpy as jnp
from jax.experimental import pallas as pl
from jax.experimental.pallas import tpu as pltpu

_LANE = 128
_SUBLANE = 8
_INV_SQRT2 = 1.0 / math.sqrt(2.0)


def _round_up(x, m):
    return ((x + m - 1) // m) * m


# ----------------------------------------------------------------------------
# Fused kernel: the whole network for one batch tile.
# ----------------------------------------------------------------------------
def _fused_mlp_kernel(n_hidden, x_ref, *refs):
    """refs = (w0, b0, ..., w_{n-1}, b_{n-1}, w_head, b_head, o_ref).

    Hidden layer: exact GELU (f32) -> bf16 matmul (f32 acc) -> bias (BN folded).
    Dropout is identity in eval mode.  Head: matmul -> bias -> sigmoid.
    """
    o_ref = refs[-1]
    wb = refs[:-1]

    h = x_ref[...]                                    # f32 [TILE_B, F0_p]
    for li in range(n_hidden):
        w = wb[2 * li][...]                           # bf16 [F_in_p, F_out_p]
        b = wb[2 * li + 1][...]                       # f32  [1, F_out_p]
        # Exact GELU (PyTorch nn.GELU default, approximate='none') in f32.
        hg = 0.5 * h * (1.0 + jax.lax.erf(h * _INV_SQRT2))
        h = jnp.dot(hg.astype(jnp.bfloat16), w,
                    preferred_element_type=jnp.float32) + b

    w_head = wb[-2][...]
    b_head = wb[-1][...]
    y = jnp.dot(h.astype(jnp.bfloat16), w_head,
                preferred_element_type=jnp.float32) + b_head
    # Sigmoid: exp on EUP + approx reciprocal on EUP (VPU stays free).
    o_ref[...] = pl.reciprocal(1.0 + jnp.exp(-y), approx=True)


# ----------------------------------------------------------------------------
# Parameters (PyTorch-equivalent init) and kernel-side packing.
# ----------------------------------------------------------------------------
def init_params(key, in_features, out_features, n_layers, n_units_layers):
    """Logical (unpadded, f32) params matching the PyTorch module."""
    assert len(n_units_layers) == n_layers
    hidden = []
    running = in_features
    for i in range(n_layers):
        key, wk = jax.random.split(key)
        fan_out, fan_in = n_units_layers[i], running
        std = math.sqrt(2.0 / (fan_in + fan_out))         # xavier_normal_
        w = jax.random.normal(wk, (fan_in, fan_out), jnp.float32) * std
        hidden.append({
            "w": w,                                        # [in, out]
            "b": jnp.zeros((fan_out,), jnp.float32),       # zeros_ init
            "gamma": jnp.ones((fan_out,), jnp.float32),    # BatchNorm defaults
            "beta": jnp.zeros((fan_out,), jnp.float32),
            "mean": jnp.zeros((fan_out,), jnp.float32),
            "var": jnp.ones((fan_out,), jnp.float32),
        })
        running = fan_out
    key, wk, bk = jax.random.split(key, 3)
    k = 1.0 / math.sqrt(running)                           # torch Linear default
    w_head = jax.random.uniform(wk, (running, out_features), jnp.float32, -k, k)
    b_head = jax.random.uniform(bk, (out_features,), jnp.float32, -k, k)
    return {"hidden": hidden, "head": {"w": w_head, "b": b_head},
            "in_features": in_features, "out_features": out_features}


def pack_params(params, eps=1e-5):
    """Fold eval-mode BN into each Linear, pad all feature dims to 128 lanes,
    and cast weights to bf16 for the MXU."""
    weights = []
    f_in = params["in_features"]
    f_out = params["out_features"]
    f_in_p = _round_up(f_in, _LANE)
    running, running_p = f_in, f_in_p
    max_fp = f_in_p
    for layer in params["hidden"]:
        scale = layer["gamma"] * jax.lax.rsqrt(layer["var"] + eps)
        w_f = layer["w"] * scale[None, :]                        # fold BN scale
        b_f = (layer["b"] - layer["mean"]) * scale + layer["beta"]
        n_out = w_f.shape[1]
        n_out_p = _round_up(n_out, _LANE)
        w_pad = jnp.zeros((running_p, n_out_p), jnp.float32)
        w_pad = w_pad.at[:running, :n_out].set(w_f)
        b_pad = jnp.zeros((1, n_out_p), jnp.float32).at[0, :n_out].set(b_f)
        weights += [w_pad.astype(jnp.bfloat16), b_pad]
        running, running_p = n_out, n_out_p
        max_fp = max(max_fp, n_out_p)
    w_h, b_h = params["head"]["w"], params["head"]["b"]
    f_out_p = _round_up(f_out, _LANE)
    w_pad = jnp.zeros((running_p, f_out_p), jnp.float32).at[:running, :f_out].set(w_h)
    b_pad = jnp.zeros((1, f_out_p), jnp.float32).at[0, :f_out].set(b_h)
    weights += [w_pad.astype(jnp.bfloat16), b_pad]
    max_fp = max(max_fp, f_out_p)
    dims = {"f_in": f_in, "f_out": f_out, "f_in_p": f_in_p, "f_out_p": f_out_p,
            "n_hidden": len(params["hidden"]), "max_fp": max_fp}
    return {"weights": weights, "dims": dims}


# ----------------------------------------------------------------------------
# Forward pass: single fused pallas_call with a batch grid.
# ----------------------------------------------------------------------------
def network_forward(packed, x):
    weights, dims = packed["weights"], packed["dims"]
    f_in, f_out = dims["f_in"], dims["f_out"]
    f_in_p, f_out_p = dims["f_in_p"], dims["f_out_p"]
    n_hidden, max_fp = dims["n_hidden"], dims["max_fp"]
    batch = x.shape[0]

    weight_bytes = sum(int(w.size) * w.dtype.itemsize for w in weights)

    # Largest batch tile that fits a conservative (v7x 64 MiB-safe) VMEM budget:
    # double-buffered activation tiles + resident weights + intermediate headroom.
    def tile_bytes(tb):
        return (2 * tb * (f_in_p + f_out_p) * 4 + 2 * weight_bytes
                + 4 * tb * max_fp * 4)

    budget = 48 << 20
    tile_b = min(256, _round_up(batch, _SUBLANE))
    while tile_b > _SUBLANE and tile_bytes(tile_b) > budget:
        tile_b //= 2
    tile_b = max(_round_up(tile_b, _SUBLANE), _SUBLANE)

    b_pad = _round_up(batch, tile_b)
    x_p = jnp.zeros((b_pad, f_in_p), jnp.float32)
    x_p = x_p.at[:batch, :f_in].set(x.astype(jnp.float32))

    grid = (b_pad // tile_b,)
    in_specs = [pl.BlockSpec((tile_b, f_in_p), lambda i: (i, 0))]
    # Weights/biases: full-extent blocks, same index every step -> VMEM resident.
    in_specs += [pl.BlockSpec(w.shape, lambda i: (0, 0)) for w in weights]
    out_spec = pl.BlockSpec((tile_b, f_out_p), lambda i: (i, 0))

    vmem_limit = int(min(max(tile_bytes(tile_b) + (8 << 20), 16 << 20), 56 << 20))

    out_p = pl.pallas_call(
        functools.partial(_fused_mlp_kernel, n_hidden),
        out_shape=jax.ShapeDtypeStruct((b_pad, f_out_p), jnp.float32),
        grid=grid,
        in_specs=in_specs,
        out_specs=out_spec,
        compiler_params=pltpu.CompilerParams(
            dimension_semantics=("parallel",),
            vmem_limit_bytes=vmem_limit),
    )(x_p, *weights)
    return out_p[:batch, :f_out]


# ----------------------------------------------------------------------------
# Pure-JAX f32 reference (eval-mode PyTorch semantics) for verification.
# ----------------------------------------------------------------------------
def reference_forward(params, x, eps=1e-5):
    h = x
    for layer in params["hidden"]:
        h = jax.nn.gelu(h, approximate=False)
        h = h @ layer["w"] + layer["b"]
        h = ((h - layer["mean"]) * jax.lax.rsqrt(layer["var"] + eps)
             * layer["gamma"] + layer["beta"])
    y = h @ params["head"]["w"] + params["head"]["b"]
    return jax.nn.sigmoid(y)


if __name__ == "__main__":
    batch = 16
    in_features = 32
    out_features = 16
    n_layers = 2
    n_units_layers = [64, 48]

    key = jax.random.PRNGKey(0)
    key, pkey, xkey = jax.random.split(key, 3)
    params = init_params(pkey, in_features, out_features, n_layers, n_units_layers)
    packed = pack_params(params)
    x = jax.random.normal(xkey, (batch, in_features), jnp.float32)

    out = network_forward(packed, x)
    out = jax.block_until_ready(out)

    assert out.shape == (batch, out_features)
    assert bool(jnp.all(jnp.isfinite(out)))
    # Sigmoid range (tiny slack for the approx-reciprocal epilogue).
    assert bool(jnp.all((out >= -1e-3) & (out <= 1.0 + 1e-3)))

    ref = reference_forward(params, x)
    err = float(jnp.max(jnp.abs(out - ref)))
    assert err < 3e-2, f"max abs error vs f32 reference: {err}"
    print("KERNEL_OK")
</pallas_src>

<mosaic_0001>
module attributes {stable_mosaic.version = 11 : i64} {
  func.func @_fused_mlp_kernel(%arg0: i32, %arg1: memref<16x128xf32, #tpu.memory_space<vmem>>, %arg2: memref<128x128xbf16, #tpu.memory_space<vmem>>, %arg3: memref<1x128xf32, #tpu.memory_space<vmem>>, %arg4: memref<128x128xbf16, #tpu.memory_space<vmem>>, %arg5: memref<1x128xf32, #tpu.memory_space<vmem>>, %arg6: memref<128x128xbf16, #tpu.memory_space<vmem>>, %arg7: memref<1x128xf32, #tpu.memory_space<vmem>>, %arg8: memref<16x128xf32, #tpu.memory_space<vmem>>) attributes {dimension_semantics = [#tpu.dimension_semantics<parallel>], iteration_bounds = array<i64: 1>, scalar_prefetch = 0 : i64, scratch_operands = 0 : i64, tpu.core_type = #tpu.core_type<tc>, window_params = [{transform_indices = @transform_0, window_bounds = array<i64: 16, 128>}, {pipeline_mode = #tpu.pipeline_mode<synchronous>, transform_indices = @transform_1, window_bounds = array<i64: 128, 128>}, {pipeline_mode = #tpu.pipeline_mode<synchronous>, transform_indices = @transform_2, window_bounds = array<i64: 1, 128>}, {pipeline_mode = #tpu.pipeline_mode<synchronous>, transform_indices = @transform_3, window_bounds = array<i64: 128, 128>}, {pipeline_mode = #tpu.pipeline_mode<synchronous>, transform_indices = @transform_4, window_bounds = array<i64: 1, 128>}, {pipeline_mode = #tpu.pipeline_mode<synchronous>, transform_indices = @transform_5, window_bounds = array<i64: 128, 128>}, {pipeline_mode = #tpu.pipeline_mode<synchronous>, transform_indices = @transform_6, window_bounds = array<i64: 1, 128>}, {transform_indices = @transform_7, window_bounds = array<i64: 16, 128>}]} {
    %c0 = arith.constant 0 : index
    %c0_0 = arith.constant 0 : index
    %0 = vector.load %arg1[%c0, %c0_0] : memref<16x128xf32, #tpu.memory_space<vmem>>, vector<16x128xf32>
    %c0_1 = arith.constant 0 : index
    %c0_2 = arith.constant 0 : index
    %1 = vector.load %arg2[%c0_1, %c0_2] : memref<128x128xbf16, #tpu.memory_space<vmem>>, vector<128x128xbf16>
    %c0_3 = arith.constant 0 : index
    %c0_4 = arith.constant 0 : index
    %2 = vector.load %arg3[%c0_3, %c0_4] : memref<1x128xf32, #tpu.memory_space<vmem>>, vector<1x128xf32>
    %cst = arith.constant 5.000000e-01 : f32
    %3 = vector.broadcast %cst : f32 to vector<16x128xf32>
    %4 = arith.mulf %3, %0 : vector<16x128xf32>
    %cst_5 = arith.constant 0.707106769 : f32
    %5 = vector.broadcast %cst_5 : f32 to vector<16x128xf32>
    %6 = arith.mulf %0, %5 : vector<16x128xf32>
    %7 = math.erf %6 : vector<16x128xf32>
    %cst_6 = arith.constant 1.000000e+00 : f32
    %8 = vector.broadcast %cst_6 : f32 to vector<16x128xf32>
    %9 = arith.addf %8, %7 : vector<16x128xf32>
    %10 = arith.mulf %4, %9 : vector<16x128xf32>
    %11 = arith.truncf %10 : vector<16x128xf32> to vector<16x128xbf16>
    %cst_7 = arith.constant dense<0.000000e+00> : vector<16x128xf32>
    %12 = tpu.matmul %11, %1, %cst_7 {dimension_numbers = #tpu.dot_dimension_numbers<[1], [0], [0], [1], [0, 0, 1, 1], [], []>} : vector<16x128xbf16>, vector<128x128xbf16>, vector<16x128xf32> -> vector<16x128xf32>
    %13 = vector.broadcast %2 : vector<1x128xf32> to vector<16x128xf32>
    %14 = arith.addf %12, %13 : vector<16x128xf32>
    %c0_8 = arith.constant 0 : index
    %c0_9 = arith.constant 0 : index
    %15 = vector.load %arg4[%c0_8, %c0_9] : memref<128x128xbf16, #tpu.memory_space<vmem>>, vector<128x128xbf16>
    %c0_10 = arith.constant 0 : index
    %c0_11 = arith.constant 0 : index
    %16 = vector.load %arg5[%c0_10, %c0_11] : memref<1x128xf32, #tpu.memory_space<vmem>>, vector<1x128xf32>
    %cst_12 = arith.constant 5.000000e-01 : f32
    %17 = vector.broadcast %cst_12 : f32 to vector<16x128xf32>
    %18 = arith.mulf %17, %14 : vector<16x128xf32>
    %cst_13 = arith.constant 0.707106769 : f32
    %19 = vector.broadcast %cst_13 : f32 to vector<16x128xf32>
    %20 = arith.mulf %14, %19 : vector<16x128xf32>
    %21 = math.erf %20 : vector<16x128xf32>
    %cst_14 = arith.constant 1.000000e+00 : f32
    %22 = vector.broadcast %cst_14 : f32 to vector<16x128xf32>
    %23 = arith.addf %22, %21 : vector<16x128xf32>
    %24 = arith.mulf %18, %23 : vector<16x128xf32>
    %25 = arith.truncf %24 : vector<16x128xf32> to vector<16x128xbf16>
    %cst_15 = arith.constant dense<0.000000e+00> : vector<16x128xf32>
    %26 = tpu.matmul %25, %15, %cst_15 {dimension_numbers = #tpu.dot_dimension_numbers<[1], [0], [0], [1], [0, 0, 1, 1], [], []>} : vector<16x128xbf16>, vector<128x128xbf16>, vector<16x128xf32> -> vector<16x128xf32>
    %27 = vector.broadcast %16 : vector<1x128xf32> to vector<16x128xf32>
    %28 = arith.addf %26, %27 : vector<16x128xf32>
    %c0_16 = arith.constant 0 : index
    %c0_17 = arith.constant 0 : index
    %29 = vector.load %arg6[%c0_16, %c0_17] : memref<128x128xbf16, #tpu.memory_space<vmem>>, vector<128x128xbf16>
    %c0_18 = arith.constant 0 : index
    %c0_19 = arith.constant 0 : index
    %30 = vector.load %arg7[%c0_18, %c0_19] : memref<1x128xf32, #tpu.memory_space<vmem>>, vector<1x128xf32>
    %31 = arith.truncf %28 : vector<16x128xf32> to vector<16x128xbf16>
    %cst_20 = arith.constant dense<0.000000e+00> : vector<16x128xf32>
    %32 = tpu.matmul %31, %29, %cst_20 {dimension_numbers = #tpu.dot_dimension_numbers<[1], [0], [0], [1], [0, 0, 1, 1], [], []>} : vector<16x128xbf16>, vector<128x128xbf16>, vector<16x128xf32> -> vector<16x128xf32>
    %33 = vector.broadcast %30 : vector<1x128xf32> to vector<16x128xf32>
    %34 = arith.addf %32, %33 : vector<16x128xf32>
    %cst_21 = arith.constant 0.000000e+00 : f32
    %35 = vector.broadcast %cst_21 : f32 to vector<16x128xf32>
    %36 = arith.subf %35, %34 : vector<16x128xf32>
    %37 = math.exp %36 : vector<16x128xf32>
    %cst_22 = arith.constant 1.000000e+00 : f32
    %38 = vector.broadcast %cst_22 : f32 to vector<16x128xf32>
    %39 = arith.addf %38, %37 : vector<16x128xf32>
    %40 = tpu.reciprocal %39 {approx = true} : vector<16x128xf32> -> vector<16x128xf32>
    %c0_23 = arith.constant 0 : index
    %c0_24 = arith.constant 0 : index
    %41 = vector.load %arg8[%c0_23, %c0_24] : memref<16x128xf32, #tpu.memory_space<vmem>>, vector<16x128xf32>
    tpu.vector_store %arg8[%c0_23, %c0_24], %40 {strides = array<i32>} : memref<16x128xf32, #tpu.memory_space<vmem>>, vector<16x128xf32>,
    return
  }
  func.func @transform_0(%arg0: i32) -> (i32, i32) {
    %c0_i32 = arith.constant 0 : i32
    %c0_i32_0 = arith.constant 0 : i32
    return %arg0, %c0_i32 : i32, i32
  }
  func.func @transform_1(%arg0: i32) -> (i32, i32) {
    %c0_i32 = arith.constant 0 : i32
    %c0_i32_0 = arith.constant 0 : i32
    %c0_i32_1 = arith.constant 0 : i32
    return %c0_i32, %c0_i32_0 : i32, i32
  }
  func.func @transform_2(%arg0: i32) -> (i32, i32) {
    %c0_i32 = arith.constant 0 : i32
    %c0_i32_0 = arith.constant 0 : i32
    %c0_i32_1 = arith.constant 0 : i32
    return %c0_i32, %c0_i32_0 : i32, i32
  }
  func.func @transform_3(%arg0: i32) -> (i32, i32) {
    %c0_i32 = arith.constant 0 : i32
    %c0_i32_0 = arith.constant 0 : i32
    %c0_i32_1 = arith.constant 0 : i32
    return %c0_i32, %c0_i32_0 : i32, i32
  }
  func.func @transform_4(%arg0: i32) -> (i32, i32) {
    %c0_i32 = arith.constant 0 : i32
    %c0_i32_0 = arith.constant 0 : i32
    %c0_i32_1 = arith.constant 0 : i32
    return %c0_i32, %c0_i32_0 : i32, i32
  }
  func.func @transform_5(%arg0: i32) -> (i32, i32) {
    %c0_i32 = arith.constant 0 : i32
    %c0_i32_0 = arith.constant 0 : i32
    %c0_i32_1 = arith.constant 0 : i32
    return %c0_i32, %c0_i32_0 : i32, i32
  }
  func.func @transform_6(%arg0: i32) -> (i32, i32) {
    %c0_i32 = arith.constant 0 : i32
    %c0_i32_0 = arith.constant 0 : i32
    %c0_i32_1 = arith.constant 0 : i32
    return %c0_i32, %c0_i32_0 : i32, i32
  }
  func.func @transform_7(%arg0: i32) -> (i32, i32) {
    %c0_i32 = arith.constant 0 : i32
    %c0_i32_0 = arith.constant 0 : i32
    return %arg0, %c0_i32 : i32, i32
  }
}

</mosaic_0001>

<llo_original>
// kernel: tpu_custom_call.1
$region0: #{tpu_custom_call.1}
  #allocation0 [shape = 'u32[]', space=smem, size = 0x4, offset = 0x4, fixed_abs, tag = 'smem constant byte address 0x4 - core index']
  #allocation1 [shape = 'u32[144,128]{1,0:T(1,128)}', space=vmem, size = 0x12000, scoped, tag = 'internal scratch']
  %s0 = inlined_call_operand.hbm [shape: f32[16,128], index: 0, kind: input, shape index: {}]
  %s1 = inlined_call_operand.hbm [shape: bf16[128,128], index: 1, kind: input, shape index: {}]
  %s2 = inlined_call_operand.vmem [shape: f32[1,128], index: 2, kind: input, shape index: {}]
  %s3 = inlined_call_operand.hbm [shape: bf16[128,128], index: 3, kind: input, shape index: {}]
  %s4 = inlined_call_operand.vmem [shape: f32[1,128], index: 4, kind: input, shape index: {}]
  %s5 = inlined_call_operand.hbm [shape: bf16[128,128], index: 5, kind: input, shape index: {}]
  %s6 = inlined_call_operand.vmem [shape: f32[1,128], index: 6, kind: input, shape index: {}]
  %s7 = inlined_call_operand.hbm [shape: f32[16,128], index: 7, kind: output, shape index: {}]
  %s8 = sld [smem:[#allocation0]]
  $region54: #{tpu_custom_call.1} parent=0
    _
  %s10 = ssub.s32 1, %s8
  %s11 = scalar_select 0, %s10, %s8
  $region1: #{tpu_custom_call.1} parent=0
    #allocation2 [shape = 'u8[8192]{0}', space=vmem, size = 0x2000, scoped, tag = 'input window, operand 0, single buffered']
    #allocation3 [shape = 's32[1]{0}', space=sflag, size = 0x4, scoped, tag = 'scoped memory for tpu_custom_call.1']
    #allocation4 [shape = 's32[1]{0}', space=sflag, size = 0x4, scoped, tag = 'scoped memory for tpu_custom_call.1']
    #allocation5 [shape = 'u8[32768]{0}', space=vmem, size = 0x8000, scoped, tag = 'input window, operand 1, single buffered']
    #allocation6 [shape = 's32[1]{0}', space=sflag, size = 0x4, scoped, tag = 'scoped memory for tpu_custom_call.1']
    #allocation7 [shape = 'u8[32768]{0}', space=vmem, size = 0x8000, scoped, tag = 'input window, operand 3, single buffered']
    #allocation8 [shape = 'u8[32768]{0}', space=vmem, size = 0x8000, scoped, tag = 'input window, operand 5, single buffered']
    #allocation9 [shape = 's32[1]{0}', space=sflag, size = 0x4, scoped, tag = 'scoped memory for tpu_custom_call.1']
    #allocation10 [shape = 'u8[8192]{0}', space=vmem, size = 0x2000, scoped, tag = 'output window, operand 0, single buffered']
    %12 = vsyncpa [#allocation3], 0
    %13 = vsyncpa [#allocation6], 0
    %14 = vsyncpa [#allocation9], 0
    %15 = vsyncpa [#allocation4], 0
    // Predicated region
    $region2: #{tpu_custom_call.1} parent=1 // pred_check
      _
    $region3: #{tpu_custom_call.1} parent=1 // pred_check_branch
      %17 = sbr.rel (0) target = $region5
    $region4: #{tpu_custom_call.1} parent=1 // pred_region
      %s19 = ssub.s32 256, 256
      %20 = vsyncadd [#allocation3], %s19
      %s21 = sshll.u32 [#allocation2], 4
      %s22 = int_to_ptr.vmem [resolvable:$true] %s21
      %27 = dma.hbm_to_vmem [thread:$0]  %s0, 256, %s22, [#allocation3], 128, 128, 8
    $region5: #{tpu_custom_call.1} parent=1 // pred_fallthru
      _
    // Predicated region
    $region6: #{tpu_custom_call.1} parent=1 // pred_check
      _
    $region7: #{tpu_custom_call.1} parent=1 // pred_check_branch
      %29 = sbr.rel (0) target = $region9
    $region8: #{tpu_custom_call.1} parent=1 // pred_region
      %s31 = ssub.s32 1024, 1024
      %32 = vsyncadd [#allocation6], %s31
      %s33 = sshll.u32 [#allocation5], 4
      %s34 = int_to_ptr.vmem [resolvable:$true] %s33
      %39 = dma.hbm_to_vmem [thread:$0]  %s1, 1024, %s34, [#allocation6], 64, 64, 4
    $region9: #{tpu_custom_call.1} parent=1 // pred_fallthru
      _
    // Predicated region
    $region10: #{tpu_custom_call.1} parent=1 // pred_check
      _
    $region11: #{tpu_custom_call.1} parent=1 // pred_check_branch
      %41 = sbr.rel (0) target = $region13
    $region12: #{tpu_custom_call.1} parent=1 // pred_region
      _
    $region13: #{tpu_custom_call.1} parent=1 // pred_fallthru
      _
    // Predicated region
    $region14: #{tpu_custom_call.1} parent=1 // pred_check
      _
    $region15: #{tpu_custom_call.1} parent=1 // pred_check_branch
      %43 = sbr.rel (0) target = $region17
    $region16: #{tpu_custom_call.1} parent=1 // pred_region
      %s45 = ssub.s32 1024, 1024
      %46 = vsyncadd [#allocation6], %s45
      %s47 = sshll.u32 [#allocation7], 4
      %s48 = int_to_ptr.vmem [resolvable:$true] %s47
      %53 = dma.hbm_to_vmem [thread:$0]  %s3, 1024, %s48, [#allocation6], 64, 64, 4
    $region17: #{tpu_custom_call.1} parent=1 // pred_fallthru
      _
    // Predicated region
    $region18: #{tpu_custom_call.1} parent=1 // pred_check
      _
    $region19: #{tpu_custom_call.1} parent=1 // pred_check_branch
      %55 = sbr.rel (0) target = $region21
    $region20: #{tpu_custom_call.1} parent=1 // pred_region
      _
    $region21: #{tpu_custom_call.1} parent=1 // pred_fallthru
      _
    // Predicated region
    $region22: #{tpu_custom_call.1} parent=1 // pred_check
      _
    $region23: #{tpu_custom_call.1} parent=1 // pred_check_branch
      %57 = sbr.rel (0) target = $region25
    $region24: #{tpu_custom_call.1} parent=1 // pred_region
      %s59 = ssub.s32 1024, 1024
      %60 = vsyncadd [#allocation9], %s59
      %s61 = sshll.u32 [#allocation8], 4
      %s62 = int_to_ptr.vmem [resolvable:$true] %s61
      %67 = dma.hbm_to_vmem [thread:$0]  %s5, 1024, %s62, [#allocation9], 64, 64, 4
    $region25: #{tpu_custom_call.1} parent=1 // pred_fallthru
      _
    // Predicated region
    $region26: #{tpu_custom_call.1} parent=1 // pred_check
      _
    $region27: #{tpu_custom_call.1} parent=1 // pred_check_branch
      %69 = sbr.rel (0) target = $region29
    $region28: #{tpu_custom_call.1} parent=1 // pred_region
      _
    $region29: #{tpu_custom_call.1} parent=1 // pred_fallthru
      _
    // Predicated region
    $region30: #{tpu_custom_call.1} parent=1 // pred_check
      _
    $region31: #{tpu_custom_call.1} parent=1 // pred_check_branch
      %71 = sbr.rel (0) target = $region33
    $region32: #{tpu_custom_call.1} parent=1 // pred_region
      %72 = dma.done [#allocation3], 256
    $region33: #{tpu_custom_call.1} parent=1 // pred_fallthru
      _
    // Predicated region
    $region34: #{tpu_custom_call.1} parent=1 // pred_check
      _
    $region35: #{tpu_custom_call.1} parent=1 // pred_check_branch
      %74 = sbr.rel (0) target = $region37
    $region36: #{tpu_custom_call.1} parent=1 // pred_region
      %75 = dma.done [#allocation6], 1024
    $region37: #{tpu_custom_call.1} parent=1 // pred_fallthru
      _
    // Predicated region
    $region38: #{tpu_custom_call.1} parent=1 // pred_check
      _
    $region39: #{tpu_custom_call.1} parent=1 // pred_check_branch
      %77 = sbr.rel (0) target = $region41
    $region40: #{tpu_custom_call.1} parent=1 // pred_region
      %78 = dma.done [#allocation6], 1024
    $region41: #{tpu_custom_call.1} parent=1 // pred_fallthru
      _
    // Predicated region
    $region42: #{tpu_custom_call.1} parent=1 // pred_check
      _
    $region43: #{tpu_custom_call.1} parent=1 // pred_check_branch
      %80 = sbr.rel (0) target = $region45
    $region44: #{tpu_custom_call.1} parent=1 // pred_region
      %81 = dma.done [#allocation9], 1024
    $region45: #{tpu_custom_call.1} parent=1 // pred_fallthru
      _
    %v83 = vld [vmem:[#allocation2] sm:$0xff]
    %v84 = vld [vmem:[#allocation2 + $0x8] sm:$0xff]
    %v85 = vld [vmem:[#allocation5] sm:$0xf]
    %v86 = vld [vmem:[#allocation5 + $0x4] sm:$0xf]
    %v87 = vld [vmem:[#allocation5 + $0x8] sm:$0xf]
    %v88 = vld [vmem:[#allocation5 + $0xc] sm:$0xf]
    %v89 = vld [vmem:[#allocation5 + $0x10] sm:$0xf]
    %v90 = vld [vmem:[#allocation5 + $0x14] sm:$0xf]
    %v91 = vld [vmem:[#allocation5 + $0x18] sm:$0xf]
    %v92 = vld [vmem:[#allocation5 + $0x1c] sm:$0xf]
    %v93 = vld [vmem:[#allocation5 + $0x20] sm:$0xf]
    %v94 = vld [vmem:[#allocation5 + $0x24] sm:$0xf]
    %v95 = vld [vmem:[#allocation5 + $0x28] sm:$0xf]
    %v96 = vld [vmem:[#allocation5 + $0x2c] sm:$0xf]
    %v97 = vld [vmem:[#allocation5 + $0x30] sm:$0xf]
    %v98 = vld [vmem:[#allocation5 + $0x34] sm:$0xf]
    %v99 = vld [vmem:[#allocation5 + $0x38] sm:$0xf]
    %v100 = vld [vmem:[#allocation5 + $0x3c] sm:$0xf]
    %v101 = vld [vmem:[%s2] sm:$0x1]
    %v102 = vmul.f32 %v83, 0.5
    %v103 = vmul.f32 %v84, 0.5
    %v104 = vmul.f32 %v83, 0.70710677
    %v105 = vmul.f32 %v84, 0.70710677
    %v106 = verf.f32.pop %v104
    %v107 = verf.f32.pop %v105
    %v108 = vadd.f32 %v106, 1.0
    %v109 = vadd.f32 %v107, 1.0
    %v110 = vmul.f32 %v102, %v108
    %v111 = vmul.f32 %v103, %v109
    %v112 = vpack.c.bf16 %v111, %v110
    %v114 = vlaneseq
    %v115 = vshrl.u32 %v114, 7
    %v116 = vsub.s32 0, %v115
    %v117 = vrot.slane %v101, %v116
    %v135 = vunpack.c.l.b16 %v85
    %v136 = vunpack.c.l.b16 %v86
    %v137 = vunpack.c.l.b16 %v87
    %v138 = vunpack.c.l.b16 %v88
    %v139 = vunpack.c.l.b16 %v89
    %v140 = vunpack.c.l.b16 %v90
    %v141 = vunpack.c.l.b16 %v91
    %v142 = vunpack.c.l.b16 %v92
    %v143 = vunpack.c.l.b16 %v93
    %v144 = vunpack.c.l.b16 %v94
    %v145 = vunpack.c.l.b16 %v95
    %v146 = vunpack.c.l.b16 %v96
    %v147 = vunpack.c.l.b16 %v97
    %v148 = vunpack.c.l.b16 %v98
    %v149 = vunpack.c.l.b16 %v99
    %v150 = vunpack.c.l.b16 %v100
    %v151 = vpack.c.b16 %v136, %v135
    %v152 = vpack.c.b16 %v138, %v137
    %v153 = vpack.c.b16 %v140, %v139
    %v154 = vpack.c.b16 %v142, %v141
    %v155 = vpack.c.b16 %v144, %v143
    %v156 = vpack.c.b16 %v146, %v145
    %v157 = vpack.c.b16 %v148, %v147
    %v158 = vpack.c.b16 %v150, %v149
    %167 = vmatprep.subr.bf16.mxu0 0
    %168 = vmatpush1.bf16.msra.mxu0 %v151
    %169 = vmatprep.subr.bf16.mxu0 0
    %170 = vmatpush1.bf16.msra.mxu0 %v152
    %171 = vmatprep.subr.bf16.mxu0 0
    %172 = vmatpush1.bf16.msra.mxu0 %v153
    %173 = vmatprep.subr.bf16.mxu0 0
    %174 = vmatpush1.bf16.msra.mxu0 %v154
    %175 = vmatprep.subr.bf16.mxu0 0
    %176 = vmatpush1.bf16.msra.mxu0 %v155
    %177 = vmatprep.subr.bf16.mxu0 0
    %178 = vmatpush1.bf16.msra.mxu0 %v156
    %179 = vmatprep.subr.bf16.mxu0 0
    %180 = vmatpush1.bf16.msra.mxu0 %v157
    %181 = vmatprep.subr.bf16.mxu0 0
    %182 = vmatpush1.bf16.msra.mxu0 %v158
    %183 = vmatprep.subr.bf16.mxu0 0
    %184 = vmatpush1.bf16.msra.mxu0 0
    %185 = vmatprep.subr.bf16.mxu0 0
    %186 = vmatpush1.bf16.msra.mxu0 0
    %187 = vmatprep.subr.bf16.mxu0 0
    %188 = vmatpush1.bf16.msra.mxu0 0
    %189 = vmatprep.subr.bf16.mxu0 0
    %190 = vmatpush1.bf16.msra.mxu0 0
    %191 = vmatprep.subr.bf16.mxu0 0
    %192 = vmatpush1.bf16.msra.mxu0 0
    %193 = vmatprep.subr.bf16.mxu0 0
    %194 = vmatpush1.bf16.msra.mxu0 0
    %195 = vmatprep.subr.bf16.mxu0 0
    %196 = vmatpush1.bf16.msra.mxu0 0
    %197 = vmatprep.subr.bf16.mxu0 0
    %198 = vmatpush1.bf16.msra.mxu0 0
    %199 = vmatprep.mubr.bf16.mxu0 0
    %200 = vmatmul.mubr.bf16.gmra.mrb[0].mxu0 %v112
    %v201 = vpop.f32.mrb[0].mxu0
    %v202 = vadd.f32 %v117, %v201
    %v203 = vpop.f32.mrb[0].mxu0
    %v204 = vpop.f32.mrb[0].mxu0
    %v205 = vadd.f32 %v117, %v204
    %v206 = vpop.f32.mrb[0].mxu0
    %207 = vdwg.mxu0
    %v208 = vld [vmem:[#allocation7] sm:$0xf]
    %v209 = vld [vmem:[#allocation7 + $0x4] sm:$0xf]
    %v210 = vld [vmem:[#allocation7 + $0x8] sm:$0xf]
    %v211 = vld [vmem:[#allocation7 + $0xc] sm:$0xf]
    %v212 = vld [vmem:[#allocation7 + $0x10] sm:$0xf]
    %v213 = vld [vmem:[#allocation7 + $0x14] sm:$0xf]
    %v214 = vld [vmem:[#allocation7 + $0x18] sm:$0xf]
    %v215 = vld [vmem:[#allocation7 + $0x1c] sm:$0xf]
    %v216 = vld [vmem:[#allocation7 + $0x20] sm:$0xf]
    %v217 = vld [vmem:[#allocation7 + $0x24] sm:$0xf]
    %v218 = vld [vmem:[#allocation7 + $0x28] sm:$0xf]
    %v219 = vld [vmem:[#allocation7 + $0x2c] sm:$0xf]
    %v220 = vld [vmem:[#allocation7 + $0x30] sm:$0xf]
    %v221 = vld [vmem:[#allocation7 + $0x34] sm:$0xf]
    %v222 = vld [vmem:[#allocation7 + $0x38] sm:$0xf]
    %v223 = vld [vmem:[#allocation7 + $0x3c] sm:$0xf]
    %v224 = vld [vmem:[%s4] sm:$0x1]
    %v225 = vmul.f32 %v202, 0.5
    %v226 = vmul.f32 %v205, 0.5
    %v227 = vmul.f32 %v202, 0.70710677
    %v228 = vmul.f32 %v205, 0.70710677
    %v229 = verf.f32.pop %v227
    %v230 = verf.f32.pop %v228
    %v231 = vadd.f32 %v229, 1.0
    %v232 = vadd.f32 %v230, 1.0
    %v233 = vmul.f32 %v225, %v231
    %v234 = vmul.f32 %v226, %v232
    %v235 = vpack.c.bf16 %v234, %v233
    %v237 = vlaneseq
    %v238 = vshrl.u32 %v237, 7
    %v239 = vsub.s32 0, %v238
    %v240 = vrot.slane %v224, %v239
    %v258 = vunpack.c.l.b16 %v208
    %v259 = vunpack.c.l.b16 %v209
    %v260 = vunpack.c.l.b16 %v210
    %v261 = vunpack.c.l.b16 %v211
    %v262 = vunpack.c.l.b16 %v212
    %v263 = vunpack.c.l.b16 %v213
    %v264 = vunpack.c.l.b16 %v214
    %v265 = vunpack.c.l.b16 %v215
    %v266 = vunpack.c.l.b16 %v216
    %v267 = vunpack.c.l.b16 %v217
    %v268 = vunpack.c.l.b16 %v218
    %v269 = vunpack.c.l.b16 %v219
    %v270 = vunpack.c.l.b16 %v220
    %v271 = vunpack.c.l.b16 %v221
    %v272 = vunpack.c.l.b16 %v222
    %v273 = vunpack.c.l.b16 %v223
    %v274 = vpack.c.b16 %v259, %v258
    %v275 = vpack.c.b16 %v261, %v260
    %v276 = vpack.c.b16 %v263, %v262
    %v277 = vpack.c.b16 %v265, %v264
    %v278 = vpack.c.b16 %v267, %v266
    %v279 = vpack.c.b16 %v269, %v268
    %v280 = vpack.c.b16 %v271, %v270
    %v281 = vpack.c.b16 %v273, %v272
    %290 = vmatprep.subr.bf16.mxu0 0
    %291 = vmatpush1.bf16.msra.mxu0 %v274
    %292 = vmatprep.subr.bf16.mxu0 0
    %293 = vmatpush1.bf16.msra.mxu0 %v275
    %294 = vmatprep.subr.bf16.mxu0 0
    %295 = vmatpush1.bf16.msra.mxu0 %v276
    %296 = vmatprep.subr.bf16.mxu0 0
    %297 = vmatpush1.bf16.msra.mxu0 %v277
    %298 = vmatprep.subr.bf16.mxu0 0
    %299 = vmatpush1.bf16.msra.mxu0 %v278
    %300 = vmatprep.subr.bf16.mxu0 0
    %301 = vmatpush1.bf16.msra.mxu0 %v279
    %302 = vmatprep.subr.bf16.mxu0 0
    %303 = vmatpush1.bf16.msra.mxu0 %v280
    %304 = vmatprep.subr.bf16.mxu0 0
    %305 = vmatpush1.bf16.msra.mxu0 %v281
    %306 = vmatprep.subr.bf16.mxu0 0
    %307 = vmatpush1.bf16.msra.mxu0 0
    %308 = vmatprep.subr.bf16.mxu0 0
    %309 = vmatpush1.bf16.msra.mxu0 0
    %310 = vmatprep.subr.bf16.mxu0 0
    %311 = vmatpush1.bf16.msra.mxu0 0
    %312 = vmatprep.subr.bf16.mxu0 0
    %313 = vmatpush1.bf16.msra.mxu0 0
    %314 = vmatprep.subr.bf16.mxu0 0
    %315 = vmatpush1.bf16.msra.mxu0 0
    %316 = vmatprep.subr.bf16.mxu0 0
    %317 = vmatpush1.bf16.msra.mxu0 0
    %318 = vmatprep.subr.bf16.mxu0 0
    %319 = vmatpush1.bf16.msra.mxu0 0
    %320 = vmatprep.subr.bf16.mxu0 0
    %321 = vmatpush1.bf16.msra.mxu0 0
    %322 = vmatprep.mubr.bf16.mxu0 0
    %323 = vmatmul.mubr.bf16.gmra.mrb[0].mxu0 %v235
    %v324 = vpop.f32.mrb[0].mxu0
    %v325 = vadd.f32 %v240, %v324
    %v326 = vpop.f32.mrb[0].mxu0
    %v327 = vpop.f32.mrb[0].mxu0
    %v328 = vadd.f32 %v240, %v327
    %v329 = vpop.f32.mrb[0].mxu0
    %330 = vdwg.mxu0
    %v331 = vld [vmem:[#allocation8] sm:$0xf]
    %v332 = vld [vmem:[#allocation8 + $0x4] sm:$0xf]
    %v333 = vld [vmem:[#allocation8 + $0x8] sm:$0xf]
    %v334 = vld [vmem:[#allocation8 + $0xc] sm:$0xf]
    %v335 = vld [vmem:[#allocation8 + $0x10] sm:$0xf]
    %v336 = vld [vmem:[#allocation8 + $0x14] sm:$0xf]
    %v337 = vld [vmem:[#allocation8 + $0x18] sm:$0xf]
    %v338 = vld [vmem:[#allocation8 + $0x1c] sm:$0xf]
    %v339 = vld [vmem:[#allocation8 + $0x20] sm:$0xf]
    %v340 = vld [vmem:[#allocation8 + $0x24] sm:$0xf]
    %v341 = vld [vmem:[#allocation8 + $0x28] sm:$0xf]
    %v342 = vld [vmem:[#allocation8 + $0x2c] sm:$0xf]
    %v343 = vld [vmem:[#allocation8 + $0x30] sm:$0xf]
    %v344 = vld [vmem:[#allocation8 + $0x34] sm:$0xf]
    %v345 = vld [vmem:[#allocation8 + $0x38] sm:$0xf]
    %v346 = vld [vmem:[#allocation8 + $0x3c] sm:$0xf]
    %v347 = vld [vmem:[%s6] sm:$0x1]
    %v348 = vpack.c.bf16 %v328, %v325
    %v350 = vlaneseq
    %v351 = vshrl.u32 %v350, 7
    %v352 = vsub.s32 0, %v351
    %v353 = vrot.slane %v347, %v352
    %v371 = vunpack.c.l.b16 %v331
    %v372 = vunpack.c.l.b16 %v332
    %v373 = vunpack.c.l.b16 %v333
    %v374 = vunpack.c.l.b16 %v334
    %v375 = vunpack.c.l.b16 %v335
    %v376 = vunpack.c.l.b16 %v336
    %v377 = vunpack.c.l.b16 %v337
    %v378 = vunpack.c.l.b16 %v338
    %v379 = vunpack.c.l.b16 %v339
    %v380 = vunpack.c.l.b16 %v340
    %v381 = vunpack.c.l.b16 %v341
    %v382 = vunpack.c.l.b16 %v342
    %v383 = vunpack.c.l.b16 %v343
    %v384 = vunpack.c.l.b16 %v344
    %v385 = vunpack.c.l.b16 %v345
    %v386 = vunpack.c.l.b16 %v346
    %v387 = vpack.c.b16 %v372, %v371
    %v388 = vpack.c.b16 %v374, %v373
    %v389 = vpack.c.b16 %v376, %v375
    %v390 = vpack.c.b16 %v378, %v377
    %v391 = vpack.c.b16 %v380, %v379
    %v392 = vpack.c.b16 %v382, %v381
    %v393 = vpack.c.b16 %v384, %v383
    %v394 = vpack.c.b16 %v386, %v385
    %403 = vmatprep.subr.bf16.mxu0 0
    %404 = vmatpush1.bf16.msra.mxu0 %v387
    %405 = vmatprep.subr.bf16.mxu0 0
    %406 = vmatpush1.bf16.msra.mxu0 %v388
    %407 = vmatprep.subr.bf16.mxu0 0
    %408 = vmatpush1.bf16.msra.mxu0 %v389
    %409 = vmatprep.subr.bf16.mxu0 0
    %410 = vmatpush1.bf16.msra.mxu0 %v390
    %411 = vmatprep.subr.bf16.mxu0 0
    %412 = vmatpush1.bf16.msra.mxu0 %v391
    %413 = vmatprep.subr.bf16.mxu0 0
    %414 = vmatpush1.bf16.msra.mxu0 %v392
    %415 = vmatprep.subr.bf16.mxu0 0
    %416 = vmatpush1.bf16.msra.mxu0 %v393
    %417 = vmatprep.subr.bf16.mxu0 0
    %418 = vmatpush1.bf16.msra.mxu0 %v394
    %419 = vmatprep.subr.bf16.mxu0 0
    %420 = vmatpush1.bf16.msra.mxu0 0
    %421 = vmatprep.subr.bf16.mxu0 0
    %422 = vmatpush1.bf16.msra.mxu0 0
    %423 = vmatprep.subr.bf16.mxu0 0
    %424 = vmatpush1.bf16.msra.mxu0 0
    %425 = vmatprep.subr.bf16.mxu0 0
    %426 = vmatpush1.bf16.msra.mxu0 0
    %427 = vmatprep.subr.bf16.mxu0 0
    %428 = vmatpush1.bf16.msra.mxu0 0
    %429 = vmatprep.subr.bf16.mxu0 0
    %430 = vmatpush1.bf16.msra.mxu0 0
    %431 = vmatprep.subr.bf16.mxu0 0
    %432 = vmatpush1.bf16.msra.mxu0 0
    %433 = vmatprep.subr.bf16.mxu0 0
    %434 = vmatpush1.bf16.msra.mxu0 0
    %435 = vmatprep.mubr.bf16.mxu0 0
    %436 = vmatmul.mubr.bf16.gmra.mrb[0].mxu0 %v348
    %v437 = vpop.f32.mrb[0].mxu0
    %v438 = vadd.f32 %v353, %v437
    %v439 = vpop.f32.mrb[0].mxu0
    %v440 = vpop.f32.mrb[0].mxu0
    %v441 = vadd.f32 %v353, %v440
    %v442 = vpop.f32.mrb[0].mxu0
    %443 = vdwg.mxu0
    %v444 = vsub.f32 0.0, %v438
    %v445 = vsub.f32 0.0, %v441
    %v446 = vmul.f32 %v444, 1.442695
    %v447 = vpow.pop %v446
    %v448 = vmul.f32 %v445, 1.442695
    %v449 = vpow.pop %v448
    %v450 = vadd.f32 %v447, 1.0
    %v451 = vadd.f32 %v449, 1.0
    %v452 = vrcp.pop %v450
    %v453 = vrcp.pop %v451
    %454 = vst [vmem:[#allocation10] sm:$0xff] %v452
    %455 = vst [vmem:[#allocation10 + $0x8] sm:$0xff] %v453
    // Predicated region
    $region46: #{tpu_custom_call.1} parent=1 // pred_check
      _
    $region47: #{tpu_custom_call.1} parent=1 // pred_check_branch
      %457 = sbr.rel (0) target = $region49
    $region48: #{tpu_custom_call.1} parent=1 // pred_region
      %s459 = ssub.s32 256, 256
      %460 = vsyncadd [#allocation4], %s459
      %s461 = sshll.u32 [#allocation10], 4
      %s462 = int_to_ptr.vmem [resolvable:$true] %s461
      %467 = dma.vmem_to_hbm [thread:$0]  %s462, 256, %s7, [#allocation4], 128, 128, 8
    $region49: #{tpu_custom_call.1} parent=1 // pred_fallthru
      _
    // Predicated region
    $region50: #{tpu_custom_call.1} parent=1 // pred_check
      _
    $region51: #{tpu_custom_call.1} parent=1 // pred_check_branch
      %469 = sbr.rel (0) target = $region53
    $region52: #{tpu_custom_call.1} parent=1 // pred_region
      %470 = dma.done [#allocation4], 256
    $region53: #{tpu_custom_call.1} parent=1 // pred_fallthru
      _
    %471 = vsyncpa [#allocation3], 1
    %472 = vsyncpa [#allocation6], 1
    %473 = vsyncpa [#allocation9], 1
    %474 = vsyncpa [#allocation4], 1

</llo_original>
